<compile_context>
chip_gen: v7x
topology: tpu7x:2x2x1
jax: 0.10.0
libtpu: 0.0.40
codegen_flags: <defaults>
</compile_context>

<pallas_src>
import functools

import jax
import jax.numpy as jnp
from jax import lax
from jax.experimental import pallas as pl
from jax.experimental.pallas import tpu as pltpu

D_HID = 16
LANE = 128     # TPU vreg lane width
SUBLANE = 8    # TPU vreg sublane count (f32)


def _round_up(n, m):
    return ((n + m - 1) // m) * m


def _iteration_block_kernel(x_ref, w_ref, b_ref, o_ref, *, num_iters, unroll):
    # x_ref: (TB, 128) packed activations
    # w_ref: (128, 128) block-diagonal kron(I_8, W^T), already in [K, N] layout
    # b_ref: (1, 128) tiled bias
    w = w_ref[...]
    b = b_ref[...].astype(jnp.float32)   # (1,128): broadcasts in the VPU add

    def step(x):
        # Standard [M,K]x[K,N] contraction -> MXU, no in-kernel transpose.
        y = lax.dot_general(
            x, w,
            dimension_numbers=(((1,), (0,)), ((), ())),
            preferred_element_type=jnp.float32,
        )
        return jnp.maximum(y + b, 0.0)

    x0 = x_ref[...].astype(jnp.float32)
    if num_iters == 1:
        out = step(x0)
    else:
        out = lax.fori_loop(0, num_iters, lambda _, xc: step(xc), x0,
                            unroll=min(unroll, num_iters))
    o_ref[...] = out.astype(o_ref.dtype)


def iteration_block(x, w, b, *, num_iters=1, block_rows=1024):
    """Pallas forward of IterationBlock applied `num_iters` times.

    x: [B, D] activations, w: [D, D] (PyTorch [out_features, in_features]),
    b: [D] bias.  num_iters=1 reproduces the module's forward exactly.
    """
    B, D = x.shape
    assert w.shape == (D, D) and b.shape == (D,)
    assert num_iters >= 1
    assert LANE % D == 0, "batch-packing path requires d_hid to divide 128"

    PACK = LANE // D            # 8 batch rows per 128-lane packed row
    DP = PACK * D               # 128

    # --- Pack the batch: pad B to a multiple of PACK, then a free row-major
    # reshape places 8 consecutive batch rows in one lane-dense 128-wide row.
    Bpad = _round_up(B, PACK)
    x_pad = x if Bpad == B else jnp.zeros((Bpad, D), x.dtype).at[:B].set(x)
    R = Bpad // PACK
    x_packed = x_pad.reshape(R, DP)

    # --- Packed (pre-transposed) weight and tiled bias.
    # (x_packed @ M + b_tiled)[i, j*D:(j+1)*D] == x[PACK*i+j] @ W^T + b,
    # so relu of it is exactly the module's forward for every packed row.
    M = jnp.kron(jnp.eye(PACK, dtype=w.dtype), w.T)   # (128, 128) block-diag
    b_tiled = jnp.tile(b, PACK).reshape(1, DP)        # (1, 128)

    # --- Tile packed rows.  Keep >= 2 grid steps when there is enough work
    # so the "parallel" axis actually shards across both v7x TensorCores.
    Rp = _round_up(R, SUBLANE)
    TB = min(_round_up(block_rows, SUBLANE), Rp)
    if TB == Rp and Rp >= 2 * SUBLANE:
        TB = _round_up((Rp + 1) // 2, SUBLANE)
    Rp = _round_up(Rp, TB)
    if Rp != R:
        x_packed = jnp.zeros((Rp, DP), x.dtype).at[:R].set(x_packed)

    kernel = functools.partial(_iteration_block_kernel,
                               num_iters=num_iters, unroll=8)

    out_packed = pl.pallas_call(
        kernel,
        out_shape=jax.ShapeDtypeStruct((Rp, DP), x.dtype),
        grid_spec=pl.GridSpec(
            grid=(Rp // TB,),
            in_specs=[
                pl.BlockSpec((TB, DP), lambda i: (i, 0)),   # packed activations
                pl.BlockSpec((DP, DP), lambda i: (0, 0)),   # packed weight (resident)
                pl.BlockSpec((1, DP), lambda i: (0, 0)),    # tiled bias (resident)
            ],
            out_specs=pl.BlockSpec((TB, DP), lambda i: (i, 0)),
        ),
        compiler_params=pltpu.CompilerParams(
            dimension_semantics=("parallel",),
        ),
    )(x_packed, M, b_tiled)

    # Unpack: drop padded packed rows, free reshape back to [Bpad, D], drop
    # padded batch rows.
    return out_packed[:R].reshape(Bpad, D)[:B]


def reference(x, w, b, num_iters=1):
    for _ in range(num_iters):
        x = jnp.maximum(x @ w.T + b, 0.0)
    return x


if __name__ == "__main__":
    key = jax.random.PRNGKey(0)
    kx, kw, kb = jax.random.split(key, 3)

    batch = 8
    x = jax.random.normal(kx, (batch, D_HID), dtype=jnp.float32)

    # Deterministic init mimicking nn.Linear's uniform(-1/sqrt(fan_in), 1/sqrt(fan_in)).
    bound = 1.0 / (D_HID ** 0.5)
    w = jax.random.uniform(kw, (D_HID, D_HID), minval=-bound, maxval=bound,
                           dtype=jnp.float32)
    b = jax.random.uniform(kb, (D_HID,), minval=-bound, maxval=bound,
                           dtype=jnp.float32)

    # Single application == the module's forward().
    out = jax.block_until_ready(iteration_block(x, w, b, num_iters=1))
    ref = reference(x, w, b, num_iters=1)
    assert out.shape == (batch, D_HID)
    assert jnp.allclose(out, ref, atol=1e-5, rtol=1e-5), "mismatch vs reference"

    # Non-multiple-of-8 batch + fused repeated application (exercises the
    # batch/row padding paths and the partially unrolled iteration loop).
    batch2 = 13
    x2 = jax.random.normal(kx, (batch2, D_HID), dtype=jnp.float32)
    out2 = jax.block_until_ready(iteration_block(x2, w, b, num_iters=4))
    ref2 = reference(x2, w, b, num_iters=4)
    assert out2.shape == (batch2, D_HID)
    assert jnp.allclose(out2, ref2, atol=1e-4, rtol=1e-4), "mismatch (fused iters)"

    print("KERNEL_OK")
</pallas_src>

<mosaic_0001>
module attributes {stable_mosaic.version = 11 : i64} {
  func.func @_iteration_block_kernel(%arg0: i32, %arg1: memref<8x128xf32, #tpu.memory_space<vmem>>, %arg2: memref<128x128xf32, #tpu.memory_space<vmem>>, %arg3: memref<1x128xf32, #tpu.memory_space<vmem>>, %arg4: memref<8x128xf32, #tpu.memory_space<vmem>>) attributes {dimension_semantics = [#tpu.dimension_semantics<parallel>], iteration_bounds = array<i64: 1>, scalar_prefetch = 0 : i64, scratch_operands = 0 : i64, tpu.core_type = #tpu.core_type<tc>, window_params = [{transform_indices = @transform_0, window_bounds = array<i64: 8, 128>}, {pipeline_mode = #tpu.pipeline_mode<synchronous>, transform_indices = @transform_1, window_bounds = array<i64: 128, 128>}, {pipeline_mode = #tpu.pipeline_mode<synchronous>, transform_indices = @transform_2, window_bounds = array<i64: 1, 128>}, {transform_indices = @transform_3, window_bounds = array<i64: 8, 128>}]} {
    %c0 = arith.constant 0 : index
    %c0_0 = arith.constant 0 : index
    %0 = vector.load %arg2[%c0, %c0_0] : memref<128x128xf32, #tpu.memory_space<vmem>>, vector<128x128xf32>
    %c0_1 = arith.constant 0 : index
    %c0_2 = arith.constant 0 : index
    %1 = vector.load %arg3[%c0_1, %c0_2] : memref<1x128xf32, #tpu.memory_space<vmem>>, vector<1x128xf32>
    %c0_3 = arith.constant 0 : index
    %c0_4 = arith.constant 0 : index
    %2 = vector.load %arg1[%c0_3, %c0_4] : memref<8x128xf32, #tpu.memory_space<vmem>>, vector<8x128xf32>
    %cst = arith.constant dense<0.000000e+00> : vector<8x128xf32>
    %3 = tpu.matmul %2, %0, %cst {dimension_numbers = #tpu.dot_dimension_numbers<[1], [0], [0], [1], [0, 0, 1, 1], [], []>} : vector<8x128xf32>, vector<128x128xf32>, vector<8x128xf32> -> vector<8x128xf32>
    %4 = vector.broadcast %1 : vector<1x128xf32> to vector<8x128xf32>
    %5 = arith.addf %3, %4 : vector<8x128xf32>
    %cst_5 = arith.constant 0.000000e+00 : f32
    %6 = vector.broadcast %cst_5 : f32 to vector<8x128xf32>
    %7 = arith.maximumf %5, %6 : vector<8x128xf32>
    %c0_6 = arith.constant 0 : index
    %c0_7 = arith.constant 0 : index
    %8 = vector.load %arg4[%c0_6, %c0_7] : memref<8x128xf32, #tpu.memory_space<vmem>>, vector<8x128xf32>
    tpu.vector_store %arg4[%c0_6, %c0_7], %7 {strides = array<i32>} : memref<8x128xf32, #tpu.memory_space<vmem>>, vector<8x128xf32>,
    return
  }
  func.func @transform_0(%arg0: i32) -> (i32, i32) {
    %c0_i32 = arith.constant 0 : i32
    %c0_i32_0 = arith.constant 0 : i32
    return %arg0, %c0_i32 : i32, i32
  }
  func.func @transform_1(%arg0: i32) -> (i32, i32) {
    %c0_i32 = arith.constant 0 : i32
    %c0_i32_0 = arith.constant 0 : i32
    %c0_i32_1 = arith.constant 0 : i32
    return %c0_i32, %c0_i32_0 : i32, i32
  }
  func.func @transform_2(%arg0: i32) -> (i32, i32) {
    %c0_i32 = arith.constant 0 : i32
    %c0_i32_0 = arith.constant 0 : i32
    %c0_i32_1 = arith.constant 0 : i32
    return %c0_i32, %c0_i32_0 : i32, i32
  }
  func.func @transform_3(%arg0: i32) -> (i32, i32) {
    %c0_i32 = arith.constant 0 : i32
    %c0_i32_0 = arith.constant 0 : i32
    return %arg0, %c0_i32 : i32, i32
  }
}

</mosaic_0001>

<llo_original>
// kernel: tpu_custom_call.1
$region0: #{tpu_custom_call.1}
  #allocation0 [shape = 'u32[]', space=smem, size = 0x4, offset = 0x4, fixed_abs, tag = 'smem constant byte address 0x4 - core index']
  #allocation1 [shape = 'u32[144,128]{1,0:T(1,128)}', space=vmem, size = 0x12000, scoped, tag = 'internal scratch']
  %s0 = inlined_call_operand.hbm [shape: f32[8,128], index: 0, kind: input, shape index: {}]
  %s1 = inlined_call_operand.hbm [shape: f32[128,128], index: 1, kind: input, shape index: {}]
  %s2 = inlined_call_operand.vmem [shape: f32[1,128], index: 2, kind: input, shape index: {}]
  %s3 = inlined_call_operand.hbm [shape: f32[8,128], index: 3, kind: output, shape index: {}]
  %s4 = sld [smem:[#allocation0]]
  $region30: #{tpu_custom_call.1} parent=0
    _
  %s6 = ssub.s32 1, %s4
  %s7 = scalar_select 0, %s6, %s4
  $region1: #{tpu_custom_call.1} parent=0
    #allocation2 [shape = 'u8[4096]{0}', space=vmem, size = 0x1000, scoped, tag = 'input window, operand 0, single buffered']
    #allocation3 [shape = 's32[1]{0}', space=sflag, size = 0x4, scoped, tag = 'scoped memory for tpu_custom_call.1']
    #allocation4 [shape = 's32[1]{0}', space=sflag, size = 0x4, scoped, tag = 'scoped memory for tpu_custom_call.1']
    #allocation5 [shape = 'u8[65536]{0}', space=vmem, size = 0x10000, scoped, tag = 'input window, operand 1, single buffered']
    #allocation6 [shape = 's32[1]{0}', space=sflag, size = 0x4, scoped, tag = 'scoped memory for tpu_custom_call.1']
    #allocation7 [shape = 'u8[4096]{0}', space=vmem, size = 0x1000, scoped, tag = 'output window, operand 0, single buffered']
    %8 = vsyncpa [#allocation3], 0
    %9 = vsyncpa [#allocation6], 0
    %10 = vsyncpa [#allocation4], 0
    // Predicated region
    $region2: #{tpu_custom_call.1} parent=1 // pred_check
      _
    $region3: #{tpu_custom_call.1} parent=1 // pred_check_branch
      %12 = sbr.rel (0) target = $region5
    $region4: #{tpu_custom_call.1} parent=1 // pred_region
      %s14 = ssub.s32 128, 128
      %15 = vsyncadd [#allocation3], %s14
      %s17 = sshll.u32 [#allocation2], 4
      %s18 = int_to_ptr.vmem [resolvable:$true] %s17
      %20 = dma.hbm_to_vmem [thread:$0]  %s0, 128, %s18, [#allocation3]
    $region5: #{tpu_custom_call.1} parent=1 // pred_fallthru
      _
    // Predicated region
    $region6: #{tpu_custom_call.1} parent=1 // pred_check
      _
    $region7: #{tpu_custom_call.1} parent=1 // pred_check_branch
      %22 = sbr.rel (0) target = $region9
    $region8: #{tpu_custom_call.1} parent=1 // pred_region
      %s24 = ssub.s32 2048, 2048
      %25 = vsyncadd [#allocation6], %s24
      %s26 = sshll.u32 [#allocation5], 4
      %s27 = int_to_ptr.vmem [resolvable:$true] %s26
      %32 = dma.hbm_to_vmem [thread:$0]  %s1, 2048, %s27, [#allocation6], 128, 128, 8
    $region9: #{tpu_custom_call.1} parent=1 // pred_fallthru
      _
    // Predicated region
    $region10: #{tpu_custom_call.1} parent=1 // pred_check
      _
    $region11: #{tpu_custom_call.1} parent=1 // pred_check_branch
      %34 = sbr.rel (0) target = $region13
    $region12: #{tpu_custom_call.1} parent=1 // pred_region
      _
    $region13: #{tpu_custom_call.1} parent=1 // pred_fallthru
      _
    // Predicated region
    $region14: #{tpu_custom_call.1} parent=1 // pred_check
      _
    $region15: #{tpu_custom_call.1} parent=1 // pred_check_branch
      %36 = sbr.rel (0) target = $region17
    $region16: #{tpu_custom_call.1} parent=1 // pred_region
      %37 = dma.done [#allocation3], 128
    $region17: #{tpu_custom_call.1} parent=1 // pred_fallthru
      _
    // Predicated region
    $region18: #{tpu_custom_call.1} parent=1 // pred_check
      _
    $region19: #{tpu_custom_call.1} parent=1 // pred_check_branch
      %39 = sbr.rel (0) target = $region21
    $region20: #{tpu_custom_call.1} parent=1 // pred_region
      %40 = dma.done [#allocation6], 2048
    $region21: #{tpu_custom_call.1} parent=1 // pred_fallthru
      _
    %v41 = vld [vmem:[#allocation5] sm:$0xff]
    %v42 = vld [vmem:[#allocation5 + $0x8] sm:$0xff]
    %v43 = vld [vmem:[#allocation5 + $0x10] sm:$0xff]
    %v44 = vld [vmem:[#allocation5 + $0x18] sm:$0xff]
    %v45 = vld [vmem:[#allocation5 + $0x20] sm:$0xff]
    %v46 = vld [vmem:[#allocation5 + $0x28] sm:$0xff]
    %v47 = vld [vmem:[#allocation5 + $0x30] sm:$0xff]
    %v48 = vld [vmem:[#allocation5 + $0x38] sm:$0xff]
    %v49 = vld [vmem:[#allocation5 + $0x40] sm:$0xff]
    %v50 = vld [vmem:[#allocation5 + $0x48] sm:$0xff]
    %v51 = vld [vmem:[#allocation5 + $0x50] sm:$0xff]
    %v52 = vld [vmem:[#allocation5 + $0x58] sm:$0xff]
    %v53 = vld [vmem:[#allocation5 + $0x60] sm:$0xff]
    %v54 = vld [vmem:[#allocation5 + $0x68] sm:$0xff]
    %v55 = vld [vmem:[#allocation5 + $0x70] sm:$0xff]
    %v56 = vld [vmem:[#allocation5 + $0x78] sm:$0xff]
    %v57 = vld [vmem:[%s2] sm:$0x1]
    %v58 = vld [vmem:[#allocation2] sm:$0xff]
    %v60 = vlaneseq
    %v61 = vshrl.u32 %v60, 7
    %v62 = vsub.s32 0, %v61
    %v63 = vrot.slane %v57, %v62
    %65 = vmatprep.subr.mxu0 0.0
    %66 = vmatpush1.msra.mxu0 %v41
    %67 = vmatprep.subr.mxu0 0.0
    %68 = vmatpush1.msra.mxu0 %v42
    %69 = vmatprep.subr.mxu0 0.0
    %70 = vmatpush1.msra.mxu0 %v43
    %71 = vmatprep.subr.mxu0 0.0
    %72 = vmatpush1.msra.mxu0 %v44
    %73 = vmatprep.subr.mxu0 0.0
    %74 = vmatpush1.msra.mxu0 %v45
    %75 = vmatprep.subr.mxu0 0.0
    %76 = vmatpush1.msra.mxu0 %v46
    %77 = vmatprep.subr.mxu0 0.0
    %78 = vmatpush1.msra.mxu0 %v47
    %79 = vmatprep.subr.mxu0 0.0
    %80 = vmatpush1.msra.mxu0 %v48
    %81 = vmatprep.subr.mxu0 0.0
    %82 = vmatpush1.msra.mxu0 %v49
    %83 = vmatprep.subr.mxu0 0.0
    %84 = vmatpush1.msra.mxu0 %v50
    %85 = vmatprep.subr.mxu0 0.0
    %86 = vmatpush1.msra.mxu0 %v51
    %87 = vmatprep.subr.mxu0 0.0
    %88 = vmatpush1.msra.mxu0 %v52
    %89 = vmatprep.subr.mxu0 0.0
    %90 = vmatpush1.msra.mxu0 %v53
    %91 = vmatprep.subr.mxu0 0.0
    %92 = vmatpush1.msra.mxu0 %v54
    %93 = vmatprep.subr.mxu0 0.0
    %94 = vmatpush1.msra.mxu0 %v55
    %95 = vmatprep.subr.mxu0 0.0
    %96 = vmatpush1.msra.mxu0 %v56
    %97 = vmatprep.subr.mxu0 0.0
    %98 = vmatpush1.msra.mxu0 0.0
    %99 = vmatprep.subr.mxu0 0.0
    %100 = vmatpush1.msra.mxu0 0.0
    %101 = vmatprep.subr.mxu0 0.0
    %102 = vmatpush1.msra.mxu0 0.0
    %103 = vmatprep.subr.mxu0 0.0
    %104 = vmatpush1.msra.mxu0 0.0
    %105 = vmatprep.subr.mxu0 0.0
    %106 = vmatpush1.msra.mxu0 0.0
    %107 = vmatprep.subr.mxu0 0.0
    %108 = vmatpush1.msra.mxu0 0.0
    %109 = vmatprep.subr.mxu0 0.0
    %110 = vmatpush1.msra.mxu0 0.0
    %111 = vmatprep.subr.mxu0 0.0
    %112 = vmatpush1.msra.mxu0 0.0
    %113 = vmatprep.subr.mxu0 0.0
    %114 = vmatpush1.msra.mxu0 0.0
    %115 = vmatprep.subr.mxu0 0.0
    %116 = vmatpush1.msra.mxu0 0.0
    %117 = vmatprep.subr.mxu0 0.0
    %118 = vmatpush1.msra.mxu0 0.0
    %119 = vmatprep.subr.mxu0 0.0
    %120 = vmatpush1.msra.mxu0 0.0
    %121 = vmatprep.subr.mxu0 0.0
    %122 = vmatpush1.msra.mxu0 0.0
    %123 = vmatprep.subr.mxu0 0.0
    %124 = vmatpush1.msra.mxu0 0.0
    %125 = vmatprep.subr.mxu0 0.0
    %126 = vmatpush1.msra.mxu0 0.0
    %127 = vmatprep.subr.mxu0 0.0
    %128 = vmatpush1.msra.mxu0 0.0
    %129 = vmatprep.mubr.f32.mxu0 0.0
    %130 = vmatmul.mubr.f32.gmra.mrb[0].mxu0 %v58
    %v131 = vpop.f32.mrb[0].mxu0
    %v132 = vadd.f32 %v63, %v131
    %v133 = vpop.f32.mrb[0].mxu0
    %134 = vdwg.mxu0
    %v135 = vmax.f32 %v132, 0.0
    %136 = vst [vmem:[#allocation7] sm:$0xff] %v135
    // Predicated region
    $region22: #{tpu_custom_call.1} parent=1 // pred_check
      _
    $region23: #{tpu_custom_call.1} parent=1 // pred_check_branch
      %138 = sbr.rel (0) target = $region25
    $region24: #{tpu_custom_call.1} parent=1 // pred_region
      %s140 = ssub.s32 128, 128
      %141 = vsyncadd [#allocation4], %s140
      %s143 = sshll.u32 [#allocation7], 4
      %s144 = int_to_ptr.vmem [resolvable:$true] %s143
      %146 = dma.vmem_to_hbm [thread:$0]  %s144, 128, %s3, [#allocation4]
    $region25: #{tpu_custom_call.1} parent=1 // pred_fallthru
      _
    // Predicated region
    $region26: #{tpu_custom_call.1} parent=1 // pred_check
      _
    $region27: #{tpu_custom_call.1} parent=1 // pred_check_branch
      %148 = sbr.rel (0) target = $region29
    $region28: #{tpu_custom_call.1} parent=1 // pred_region
      %149 = dma.done [#allocation4], 128
    $region29: #{tpu_custom_call.1} parent=1 // pred_fallthru
      _
    %150 = vsyncpa [#allocation3], 1
    %151 = vsyncpa [#allocation6], 1
    %152 = vsyncpa [#allocation4], 1

</llo_original>
